<compile_context>
chip_gen: v7x
topology: tpu7x:2x2x1
jax: 0.10.0
libtpu: 0.0.40
codegen_flags: <defaults>
</compile_context>

<pallas_src>
import functools

import jax
import jax.numpy as jnp
import numpy as np
from jax.experimental import pallas as pl
from jax.experimental.pallas import tpu as pltpu

_VMEM_TILE_BUDGET = 40 * 1024 * 1024   # sizing budget for the batch tile
_VMEM_LIMIT_BYTES = 48 * 1024 * 1024   # compiler scoped-VMEM ceiling (safe on v5e/v6e/v7x)


def _feature_ranges(dims, num_output, output_mode):
    dims = tuple(int(d) for d in dims)
    if max(dims) != num_output:
        raise ValueError(
            f"Max of dimensions {dims} must equal encoder num_output={num_output}.")
    if output_mode == "overlapping":
        return tuple((0, d) for d in dims)
    if output_mode == "separate":
        starts = (0,) + dims[:-1]
        return tuple(zip(starts, dims))
    raise ValueError(f"Unknown output_mode: {output_mode!r}")


def _pick_batch_tile(n, c, hdim, d, total, out_bytes, block_batch):
    """Largest sublane-aligned batch tile that fits the VMEM budget, with >=2 grid steps."""
    # double-buffered input+output tiles + live f32 intermediates (h, emb, emb2, pieces)
    per_row = 2 * (c * 4 + total * out_bytes) + (hdim + 3 * d) * 4
    # double-buffered bf16 weights + f32 biases (grid-invariant, but conservatively x2)
    weight_bytes = 2 * ((c * hdim + hdim * d) * 2 + (hdim + d) * 4)
    fit = max((_VMEM_TILE_BUDGET - weight_bytes) // max(per_row, 1), 8)
    tb = min(int(block_batch), int(fit), n)
    if n >= 16:
        # keep at least 2 grid steps so the "parallel" batch axis can be
        # sharded across v7x's two TensorCores (no-op on v5e/v6e)
        tb = min(tb, (n + 1) // 2)
        tb = max(8, (tb // 8) * 8)
    return max(1, tb)


def _multiobjective_kernel(x_ref, w1_ref, b1_ref, w2_ref, b2_ref, *out_refs,
                           ranges, renormalize, eps, matmul_dtype):
    f32 = jnp.float32

    # ---- base encoder: Linear -> GELU -> Linear (MXU in bf16, f32 accum) ----
    # Weights arrive pre-cast to bf16 from the wrapper; only the activation
    # tile (already resident in VMEM) is cast here.
    x = x_ref[...].astype(matmul_dtype)
    h = jnp.dot(x, w1_ref[...], preferred_element_type=f32) + b1_ref[...]
    # TODO(synk): torch.nn.GELU defaults to the exact erf form; tanh-approx GELU
    # is used here (guaranteed Mosaic lowering); numerics match only to ~1e-2.
    h = jax.nn.gelu(h)
    emb = jnp.dot(h.astype(matmul_dtype), w2_ref[...],
                  preferred_element_type=f32) + b2_ref[...]

    n_rows = emb.shape[0]
    if renormalize:
        # Prefix-sum reuse: square every column once, reduce every column
        # segment once, and reconstruct each (overlapping) slice norm from the
        # cumulative boundary sums instead of re-squaring/re-reducing.
        emb2 = emb * emb
        bounds = sorted({0, *(a for a, _ in ranges), *(b for _, b in ranges)})
        cum = {0: jnp.zeros((n_rows, 1), f32)}
        for p, q in zip(bounds[:-1], bounds[1:]):
            cum[q] = cum[p] + jnp.sum(emb2[:, p:q], axis=1, keepdims=True)
        for (a, b), o_ref in zip(ranges, out_refs):
            # eps guard: zero-norm rows (and padded rows of a ragged last tile)
            # stay finite instead of inf/NaN.
            inv = jax.lax.rsqrt(jnp.maximum(cum[b] - cum[a], eps))  # EUP rsqrt
            o_ref[...] = (emb[:, a:b] * inv).astype(o_ref.dtype)
    else:
        for (a, b), o_ref in zip(ranges, out_refs):
            o_ref[...] = emb[:, a:b].astype(o_ref.dtype)


def multiobjective_forward(x, w1, b1, w2, b2, dims, *,
                           renormalize=True, output_mode="overlapping",
                           block_batch=1024, matmul_dtype=jnp.bfloat16,
                           out_dtype=jnp.float32, eps=1e-12):
    """Returns a tuple of (batch, d_i) arrays, one per feature range."""
    n, c = x.shape
    hdim = w1.shape[1]
    d = w2.shape[1]
    ranges = _feature_ranges(dims, d, output_mode)
    widths = [b - a for a, b in ranges]
    total = sum(widths)

    # One-time weight cast (wrapper-side): halves weight HBM fetch + VMEM and
    # removes the per-grid-step VPU conversions the old kernel was doing.
    w1m = w1.astype(matmul_dtype)
    w2m = w2.astype(matmul_dtype)
    b1f = jnp.asarray(b1, jnp.float32).reshape(1, hdim)
    b2f = jnp.asarray(b2, jnp.float32).reshape(1, d)

    out_bytes = jnp.dtype(out_dtype).itemsize
    tb = _pick_batch_tile(n, c, hdim, d, total, out_bytes, block_batch)
    grid = (pl.cdiv(n, tb),)

    kernel = functools.partial(
        _multiobjective_kernel, ranges=ranges, renormalize=renormalize,
        eps=float(eps), matmul_dtype=matmul_dtype)

    # One output array per feature range: no zero-padded lanes, and no wrapper
    # re-slice pass (the tuple comes straight out of the pallas_call).
    out_shapes = tuple(jax.ShapeDtypeStruct((n, w), out_dtype) for w in widths)
    out_specs = tuple(pl.BlockSpec((tb, w), lambda i: (i, 0)) for w in widths)

    outs = pl.pallas_call(
        kernel,
        out_shape=out_shapes,
        grid=grid,
        in_specs=[
            pl.BlockSpec((tb, c), lambda i: (i, 0)),      # batch-tiled input
            pl.BlockSpec((c, hdim), lambda i: (0, 0)),    # grid-invariant weights (bf16)
            pl.BlockSpec((1, hdim), lambda i: (0, 0)),    # f32 bias
            pl.BlockSpec((hdim, d), lambda i: (0, 0)),
            pl.BlockSpec((1, d), lambda i: (0, 0)),
        ],
        out_specs=out_specs,
        compiler_params=pltpu.CompilerParams(
            dimension_semantics=("parallel",),
            vmem_limit_bytes=_VMEM_LIMIT_BYTES),
    )(x, w1m, b1f, w2m, b2f)
    return outs


if __name__ == "__main__":
    # Small, deterministic shapes. With n=64 the tile picker caps tb at 32, so
    # the grid has 2 parallel steps (exercises pipelining / megacore sharding).
    N, C, H, D = 64, 32, 32, 16            # batch, input feats, hidden, num_output
    dims = (4, 8, 16)                      # overlapping feature ranges (max == D)

    key = jax.random.PRNGKey(0)
    kx, k1, k2 = jax.random.split(key, 3)
    x = jax.random.normal(kx, (N, C), jnp.float32)
    w1 = jax.random.normal(k1, (C, H), jnp.float32) * (1.0 / np.sqrt(C))
    b1 = jnp.zeros((1, H), jnp.float32)
    w2 = jax.random.normal(k2, (H, D), jnp.float32) * (1.0 / np.sqrt(H))
    b2 = jnp.zeros((1, D), jnp.float32)

    outs = multiobjective_forward(x, w1, b1, w2, b2, dims, renormalize=True)
    outs = jax.block_until_ready(outs)

    # Pure-JAX reference with the same bf16-matmul / f32-accumulate recipe.
    mm = jnp.bfloat16
    h = jnp.dot(x.astype(mm), w1.astype(mm),
                preferred_element_type=jnp.float32) + b1
    h = jax.nn.gelu(h)
    emb = jnp.dot(h.astype(mm), w2.astype(mm),
                  preferred_element_type=jnp.float32) + b2
    for o, dd in zip(outs, dims):
        y = emb[:, :dd]
        ref = y / jnp.linalg.norm(y, axis=1, keepdims=True)
        np.testing.assert_allclose(np.asarray(o), np.asarray(ref),
                                   rtol=1e-2, atol=1e-2)

    print("KERNEL_OK")
</pallas_src>

<mosaic_0001>
module attributes {stable_mosaic.version = 11 : i64} {
  func.func @_multiobjective_kernel(%arg0: i32, %arg1: memref<32x32xf32, #tpu.memory_space<vmem>>, %arg2: memref<32x32xbf16, #tpu.memory_space<vmem>>, %arg3: memref<1x32xf32, #tpu.memory_space<vmem>>, %arg4: memref<32x16xbf16, #tpu.memory_space<vmem>>, %arg5: memref<1x16xf32, #tpu.memory_space<vmem>>, %arg6: memref<32x4xf32, #tpu.memory_space<vmem>>, %arg7: memref<32x8xf32, #tpu.memory_space<vmem>>, %arg8: memref<32x16xf32, #tpu.memory_space<vmem>>) attributes {dimension_semantics = [#tpu.dimension_semantics<parallel>], iteration_bounds = array<i64: 2>, scalar_prefetch = 0 : i64, scratch_operands = 0 : i64, tpu.core_type = #tpu.core_type<tc>, window_params = [{transform_indices = @transform_0, window_bounds = array<i64: 32, 32>}, {pipeline_mode = #tpu.pipeline_mode<synchronous>, transform_indices = @transform_1, window_bounds = array<i64: 32, 32>}, {pipeline_mode = #tpu.pipeline_mode<synchronous>, transform_indices = @transform_2, window_bounds = array<i64: 1, 32>}, {pipeline_mode = #tpu.pipeline_mode<synchronous>, transform_indices = @transform_3, window_bounds = array<i64: 32, 16>}, {pipeline_mode = #tpu.pipeline_mode<synchronous>, transform_indices = @transform_4, window_bounds = array<i64: 1, 16>}, {transform_indices = @transform_5, window_bounds = array<i64: 32, 4>}, {transform_indices = @transform_6, window_bounds = array<i64: 32, 8>}, {transform_indices = @transform_7, window_bounds = array<i64: 32, 16>}]} {
    %c0 = arith.constant 0 : index
    %c0_0 = arith.constant 0 : index
    %0 = vector.load %arg1[%c0, %c0_0] : memref<32x32xf32, #tpu.memory_space<vmem>>, vector<32x32xf32>
    %1 = arith.truncf %0 : vector<32x32xf32> to vector<32x32xbf16>
    %c0_1 = arith.constant 0 : index
    %c0_2 = arith.constant 0 : index
    %2 = vector.load %arg2[%c0_1, %c0_2] : memref<32x32xbf16, #tpu.memory_space<vmem>>, vector<32x32xbf16>
    %cst = arith.constant dense<0.000000e+00> : vector<32x32xf32>
    %3 = tpu.matmul %1, %2, %cst {dimension_numbers = #tpu.dot_dimension_numbers<[1], [0], [0], [1], [0, 0, 1, 1], [], []>} : vector<32x32xbf16>, vector<32x32xbf16>, vector<32x32xf32> -> vector<32x32xf32>
    %c0_3 = arith.constant 0 : index
    %c0_4 = arith.constant 0 : index
    %4 = vector.load %arg3[%c0_3, %c0_4] : memref<1x32xf32, #tpu.memory_space<vmem>>, vector<1x32xf32>
    %5 = vector.broadcast %4 : vector<1x32xf32> to vector<32x32xf32>
    %6 = arith.addf %3, %5 : vector<32x32xf32>
    %7 = arith.mulf %6, %6 : vector<32x32xf32>
    %8 = arith.mulf %6, %7 : vector<32x32xf32>
    %cst_5 = arith.constant 4.471500e-02 : f32
    %9 = vector.broadcast %cst_5 : f32 to vector<32x32xf32>
    %10 = arith.mulf %9, %8 : vector<32x32xf32>
    %11 = arith.addf %6, %10 : vector<32x32xf32>
    %cst_6 = arith.constant 0.797884583 : f32
    %12 = vector.broadcast %cst_6 : f32 to vector<32x32xf32>
    %13 = arith.mulf %12, %11 : vector<32x32xf32>
    %14 = math.tanh %13 : vector<32x32xf32>
    %cst_7 = arith.constant 1.000000e+00 : f32
    %15 = vector.broadcast %cst_7 : f32 to vector<32x32xf32>
    %16 = arith.addf %15, %14 : vector<32x32xf32>
    %cst_8 = arith.constant 5.000000e-01 : f32
    %17 = vector.broadcast %cst_8 : f32 to vector<32x32xf32>
    %18 = arith.mulf %17, %16 : vector<32x32xf32>
    %19 = arith.mulf %6, %18 : vector<32x32xf32>
    %20 = arith.truncf %19 : vector<32x32xf32> to vector<32x32xbf16>
    %c0_9 = arith.constant 0 : index
    %c0_10 = arith.constant 0 : index
    %21 = vector.load %arg4[%c0_9, %c0_10] : memref<32x16xbf16, #tpu.memory_space<vmem>>, vector<32x16xbf16>
    %cst_11 = arith.constant dense<0.000000e+00> : vector<32x16xf32>
    %22 = tpu.matmul %20, %21, %cst_11 {dimension_numbers = #tpu.dot_dimension_numbers<[1], [0], [0], [1], [0, 0, 1, 1], [], []>} : vector<32x32xbf16>, vector<32x16xbf16>, vector<32x16xf32> -> vector<32x16xf32>
    %c0_12 = arith.constant 0 : index
    %c0_13 = arith.constant 0 : index
    %23 = vector.load %arg5[%c0_12, %c0_13] : memref<1x16xf32, #tpu.memory_space<vmem>>, vector<1x16xf32>
    %24 = vector.broadcast %23 : vector<1x16xf32> to vector<32x16xf32>
    %25 = arith.addf %22, %24 : vector<32x16xf32>
    %26 = arith.mulf %25, %25 : vector<32x16xf32>
    %cst_14 = arith.constant 0.000000e+00 : f32
    %27 = vector.broadcast %cst_14 : f32 to vector<32x1xf32>
    %28 = vector.extract_strided_slice %26 {offsets = [0, 0], sizes = [32, 4], strides = [1, 1]} : vector<32x16xf32> to vector<32x4xf32>
    %cst_15 = arith.constant dense<0.000000e+00> : vector<32xf32>
    %29 = vector.multi_reduction <add>, %28, %cst_15 [1] : vector<32x4xf32> to vector<32xf32>
    %30 = vector.shape_cast %29 : vector<32xf32> to vector<32x1xf32>
    %31 = arith.addf %27, %30 : vector<32x1xf32>
    %32 = vector.extract_strided_slice %26 {offsets = [0, 4], sizes = [32, 4], strides = [1, 1]} : vector<32x16xf32> to vector<32x4xf32>
    %cst_16 = arith.constant dense<0.000000e+00> : vector<32xf32>
    %33 = vector.multi_reduction <add>, %32, %cst_16 [1] : vector<32x4xf32> to vector<32xf32>
    %34 = vector.shape_cast %33 : vector<32xf32> to vector<32x1xf32>
    %35 = arith.addf %31, %34 : vector<32x1xf32>
    %36 = vector.extract_strided_slice %26 {offsets = [0, 8], sizes = [32, 8], strides = [1, 1]} : vector<32x16xf32> to vector<32x8xf32>
    %cst_17 = arith.constant dense<0.000000e+00> : vector<32xf32>
    %37 = vector.multi_reduction <add>, %36, %cst_17 [1] : vector<32x8xf32> to vector<32xf32>
    %38 = vector.shape_cast %37 : vector<32xf32> to vector<32x1xf32>
    %39 = arith.addf %35, %38 : vector<32x1xf32>
    %40 = arith.subf %31, %27 : vector<32x1xf32>
    %cst_18 = arith.constant 9.99999996E-13 : f32
    %41 = vector.broadcast %cst_18 : f32 to vector<32x1xf32>
    %42 = arith.maximumf %40, %41 : vector<32x1xf32>
    %43 = math.rsqrt %42 : vector<32x1xf32>
    %44 = vector.extract_strided_slice %25 {offsets = [0, 0], sizes = [32, 4], strides = [1, 1]} : vector<32x16xf32> to vector<32x4xf32>
    %45 = vector.broadcast %43 : vector<32x1xf32> to vector<32x4xf32>
    %46 = arith.mulf %44, %45 : vector<32x4xf32>
    %c0_19 = arith.constant 0 : index
    %c0_20 = arith.constant 0 : index
    %47 = vector.load %arg6[%c0_19, %c0_20] : memref<32x4xf32, #tpu.memory_space<vmem>>, vector<32x4xf32>
    tpu.vector_store %arg6[%c0_19, %c0_20], %46 {strides = array<i32>} : memref<32x4xf32, #tpu.memory_space<vmem>>, vector<32x4xf32>,
    %48 = arith.subf %35, %27 : vector<32x1xf32>
    %cst_21 = arith.constant 9.99999996E-13 : f32
    %49 = vector.broadcast %cst_21 : f32 to vector<32x1xf32>
    %50 = arith.maximumf %48, %49 : vector<32x1xf32>
    %51 = math.rsqrt %50 : vector<32x1xf32>
    %52 = vector.extract_strided_slice %25 {offsets = [0, 0], sizes = [32, 8], strides = [1, 1]} : vector<32x16xf32> to vector<32x8xf32>
    %53 = vector.broadcast %51 : vector<32x1xf32> to vector<32x8xf32>
    %54 = arith.mulf %52, %53 : vector<32x8xf32>
    %c0_22 = arith.constant 0 : index
    %c0_23 = arith.constant 0 : index
    %55 = vector.load %arg7[%c0_22, %c0_23] : memref<32x8xf32, #tpu.memory_space<vmem>>, vector<32x8xf32>
    tpu.vector_store %arg7[%c0_22, %c0_23], %54 {strides = array<i32>} : memref<32x8xf32, #tpu.memory_space<vmem>>, vector<32x8xf32>,
    %56 = arith.subf %39, %27 : vector<32x1xf32>
    %cst_24 = arith.constant 9.99999996E-13 : f32
    %57 = vector.broadcast %cst_24 : f32 to vector<32x1xf32>
    %58 = arith.maximumf %56, %57 : vector<32x1xf32>
    %59 = math.rsqrt %58 : vector<32x1xf32>
    %60 = vector.broadcast %59 : vector<32x1xf32> to vector<32x16xf32>
    %61 = arith.mulf %25, %60 : vector<32x16xf32>
    %c0_25 = arith.constant 0 : index
    %c0_26 = arith.constant 0 : index
    %62 = vector.load %arg8[%c0_25, %c0_26] : memref<32x16xf32, #tpu.memory_space<vmem>>, vector<32x16xf32>
    tpu.vector_store %arg8[%c0_25, %c0_26], %61 {strides = array<i32>} : memref<32x16xf32, #tpu.memory_space<vmem>>, vector<32x16xf32>,
    return
  }
  func.func @transform_0(%arg0: i32) -> (i32, i32) {
    %c0_i32 = arith.constant 0 : i32
    %c0_i32_0 = arith.constant 0 : i32
    return %arg0, %c0_i32 : i32, i32
  }
  func.func @transform_1(%arg0: i32) -> (i32, i32) {
    %c0_i32 = arith.constant 0 : i32
    %c0_i32_0 = arith.constant 0 : i32
    %c0_i32_1 = arith.constant 0 : i32
    return %c0_i32, %c0_i32_0 : i32, i32
  }
  func.func @transform_2(%arg0: i32) -> (i32, i32) {
    %c0_i32 = arith.constant 0 : i32
    %c0_i32_0 = arith.constant 0 : i32
    %c0_i32_1 = arith.constant 0 : i32
    return %c0_i32, %c0_i32_0 : i32, i32
  }
  func.func @transform_3(%arg0: i32) -> (i32, i32) {
    %c0_i32 = arith.constant 0 : i32
    %c0_i32_0 = arith.constant 0 : i32
    %c0_i32_1 = arith.constant 0 : i32
    return %c0_i32, %c0_i32_0 : i32, i32
  }
  func.func @transform_4(%arg0: i32) -> (i32, i32) {
    %c0_i32 = arith.constant 0 : i32
    %c0_i32_0 = arith.constant 0 : i32
    %c0_i32_1 = arith.constant 0 : i32
    return %c0_i32, %c0_i32_0 : i32, i32
  }
  func.func @transform_5(%arg0: i32) -> (i32, i32) {
    %c0_i32 = arith.constant 0 : i32
    %c0_i32_0 = arith.constant 0 : i32
    return %arg0, %c0_i32 : i32, i32
  }
  func.func @transform_6(%arg0: i32) -> (i32, i32) {
    %c0_i32 = arith.constant 0 : i32
    %c0_i32_0 = arith.constant 0 : i32
    return %arg0, %c0_i32 : i32, i32
  }
  func.func @transform_7(%arg0: i32) -> (i32, i32) {
    %c0_i32 = arith.constant 0 : i32
    %c0_i32_0 = arith.constant 0 : i32
    return %arg0, %c0_i32 : i32, i32
  }
}

</mosaic_0001>

<llo_original>
// kernel: tpu_custom_call.1
$region0: #{tpu_custom_call.1}
  #allocation0 [shape = 'u32[]', space=smem, size = 0x4, offset = 0x4, fixed_abs, tag = 'smem constant byte address 0x4 - core index']
  #allocation1 [shape = 'u32[144,128]{1,0:T(1,128)}', space=vmem, size = 0x12000, scoped, tag = 'internal scratch']
  %s0 = inlined_call_operand.vmem [shape: f32[64,32], index: 0, kind: input, shape index: {}]
  %s1 = inlined_call_operand.vmem [shape: bf16[32,32], index: 1, kind: input, shape index: {}]
  %s2 = inlined_call_operand.vmem [shape: f32[1,32], index: 2, kind: input, shape index: {}]
  %s3 = inlined_call_operand.vmem [shape: bf16[32,16], index: 3, kind: input, shape index: {}]
  %s4 = inlined_call_operand.vmem [shape: f32[1,16], index: 4, kind: input, shape index: {}]
  %s5 = inlined_call_operand.vmem [shape: f32[64,4], index: 5, kind: output, shape index: {0}]
  %s6 = inlined_call_operand.vmem [shape: f32[64,8], index: 6, kind: output, shape index: {1}]
  %s7 = inlined_call_operand.vmem [shape: f32[64,16], index: 7, kind: output, shape index: {2}]
  %8 = xla_tuple %s5, %s6, %s7
  %s9 = sld [smem:[#allocation0]]
  $region69: #{tpu_custom_call.1} parent=0
    _
  %s11 = ssub.s32 1, %s9
  %s12 = scalar_select 0, %s11, %s9
  loop: start=0, step=1, limit=4
  $region2: #{tpu_custom_call.1} parent=0 // loop_pre_header
    _
  $region3: #{tpu_custom_call.1} parent=0 // loop_header
    %s14 = sphi 0, %s18
    %p15 = scmp.ge.s32.totalorder %s14, 4
    %s24 = sphi 0, %s26
    %s27 = sphi 0, %s24
    %s28 = sphi 0, %s27
    %s44 = sphi 0, %s28
    %s48 = sphi 0, %s48
    %s50 = sphi 0, %s48
    %s51 = sphi 0, %s50
    %s65 = sphi 0, %s51
    %s69 = sphi 0, %s69
    %s71 = sphi 0, %s69
    %s72 = sphi 0, %s71
    %s86 = sphi 0, %s72
    %s90 = sphi 0, %s90
    %s92 = sphi 0, %s90
    %s93 = sphi 0, %s92
    %s107 = sphi 0, %s93
    %s111 = sphi 0, %s111
    %s113 = sphi 0, %s111
    %s114 = sphi 0, %s113
    %s128 = sphi 0, %s114
    %s134 = sphi 0, %s136
    %s137 = sphi 0, %s134
    %s138 = sphi 0, %s137
    %s154 = sphi 0, %s138
    %s160 = sphi 0, %s162
    %s163 = sphi 0, %s160
    %s164 = sphi 0, %s163
    %s180 = sphi 0, %s164
    %s186 = sphi 0, %s188
    %s189 = sphi 0, %s186
    %s190 = sphi 0, %s189
    %s206 = sphi 0, %s190
  $region4: #{tpu_custom_call.1} parent=0 // loop_header_branch
    %17 = sbr.rel (%p15) target = $region8
  $region5: #{tpu_custom_call.1} parent=0 // loop_body
    %s19 = ssub.s32 %s14, 1
    %s20 = ssub.s32 %s14, 2
    %s21 = sadd.s32 %s14, 1
    %s22 = ssub.s32 %s14, %s21
    %p23 = scmp.eq.s32.totalorder %s22, 0
    %s25 = sadd.s32 %s24, 1
    %s26 = scalar_select %p23, %s24, %s25
    %p29 = pneg %p23
    %p30 = scmp.eq.s32.totalorder %s14, 1
    %p31 = por %p29, %p30
    %p32 = scmp.ne.s32.totalorder %s24, %s27
    %p33 = scmp.eq.s32.totalorder %s14, 0
    %p34 = por %p32, %p33
    %p35 = scmp.ne.s32.totalorder %s24, %s27
    %p36 = scmp.eq.s32.totalorder %s19, 1
    %p37 = por %p35, %p36
    %p38 = scmp.ne.s32.totalorder %s27, %s28
    %p39 = scmp.eq.s32.totalorder %s19, 0
    %p40 = por %p38, %p39
    %p41 = scmp.ne.s32.totalorder %s27, %s28
    %p42 = scmp.eq.s32.totalorder %s20, 1
    %p43 = por %p41, %p42
    %p45 = scmp.ne.s32.totalorder %s28, %s44
    %p46 = scmp.eq.s32.totalorder %s20, 0
    %p47 = por %p45, %p46
    %s49 = sadd.s32 %s48, 1
    %p52 = scmp.eq.s32.totalorder %s14, 1
    %p53 = scmp.ne.s32.totalorder %s48, %s50
    %p54 = scmp.eq.s32.totalorder %s14, 0
    %p55 = por %p53, %p54
    %p56 = scmp.ne.s32.totalorder %s48, %s50
    %p57 = scmp.eq.s32.totalorder %s19, 1
    %p58 = por %p56, %p57
    %p59 = scmp.ne.s32.totalorder %s50, %s51
    %p60 = scmp.eq.s32.totalorder %s19, 0
    %p61 = por %p59, %p60
    %p62 = scmp.ne.s32.totalorder %s50, %s51
    %p63 = scmp.eq.s32.totalorder %s20, 1
    %p64 = por %p62, %p63
    %p66 = scmp.ne.s32.totalorder %s51, %s65
    %p67 = scmp.eq.s32.totalorder %s20, 0
    %p68 = por %p66, %p67
    %s70 = sadd.s32 %s69, 1
    %p73 = scmp.eq.s32.totalorder %s14, 1
    %p74 = scmp.ne.s32.totalorder %s69, %s71
    %p75 = scmp.eq.s32.totalorder %s14, 0
    %p76 = por %p74, %p75
    %p77 = scmp.ne.s32.totalorder %s69, %s71
    %p78 = scmp.eq.s32.totalorder %s19, 1
    %p79 = por %p77, %p78
    %p80 = scmp.ne.s32.totalorder %s71, %s72
    %p81 = scmp.eq.s32.totalorder %s19, 0
    %p82 = por %p80, %p81
    %p83 = scmp.ne.s32.totalorder %s71, %s72
    %p84 = scmp.eq.s32.totalorder %s20, 1
    %p85 = por %p83, %p84
    %p87 = scmp.ne.s32.totalorder %s72, %s86
    %p88 = scmp.eq.s32.totalorder %s20, 0
    %p89 = por %p87, %p88
    %s91 = sadd.s32 %s90, 1
    %p94 = scmp.eq.s32.totalorder %s14, 1
    %p95 = scmp.ne.s32.totalorder %s90, %s92
    %p96 = scmp.eq.s32.totalorder %s14, 0
    %p97 = por %p95, %p96
    %p98 = scmp.ne.s32.totalorder %s90, %s92
    %p99 = scmp.eq.s32.totalorder %s19, 1
    %p100 = por %p98, %p99
    %p101 = scmp.ne.s32.totalorder %s92, %s93
    %p102 = scmp.eq.s32.totalorder %s19, 0
    %p103 = por %p101, %p102
    %p104 = scmp.ne.s32.totalorder %s92, %s93
    %p105 = scmp.eq.s32.totalorder %s20, 1
    %p106 = por %p104, %p105
    %p108 = scmp.ne.s32.totalorder %s93, %s107
    %p109 = scmp.eq.s32.totalorder %s20, 0
    %p110 = por %p108, %p109
    %s112 = sadd.s32 %s111, 1
    %p115 = scmp.eq.s32.totalorder %s14, 1
    %p116 = scmp.ne.s32.totalorder %s111, %s113
    %p117 = scmp.eq.s32.totalorder %s14, 0
    %p118 = por %p116, %p117
    %p119 = scmp.ne.s32.totalorder %s111, %s113
    %p120 = scmp.eq.s32.totalorder %s19, 1
    %p121 = por %p119, %p120
    %p122 = scmp.ne.s32.totalorder %s113, %s114
    %p123 = scmp.eq.s32.totalorder %s19, 0
    %p124 = por %p122, %p123
    %p125 = scmp.ne.s32.totalorder %s113, %s114
    %p126 = scmp.eq.s32.totalorder %s20, 1
    %p127 = por %p125, %p126
    %p129 = scmp.ne.s32.totalorder %s114, %s128
    %p130 = scmp.eq.s32.totalorder %s20, 0
    %p131 = por %p129, %p130
    %s132 = ssub.s32 %s14, %s21
    %p133 = scmp.eq.s32.totalorder %s132, 0
    %s135 = sadd.s32 %s134, 1
    %s136 = scalar_select %p133, %s134, %s135
    %p139 = pneg %p133
    %p140 = scmp.eq.s32.totalorder %s14, 1
    %p141 = por %p139, %p140
    %p142 = scmp.ne.s32.totalorder %s134, %s137
    %p143 = scmp.eq.s32.totalorder %s14, 0
    %p144 = por %p142, %p143
    %p145 = scmp.ne.s32.totalorder %s134, %s137
    %p146 = scmp.eq.s32.totalorder %s19, 1
    %p147 = por %p145, %p146
    %p148 = scmp.ne.s32.totalorder %s137, %s138
    %p149 = scmp.eq.s32.totalorder %s19, 0
    %p150 = por %p148, %p149
    %p151 = scmp.ne.s32.totalorder %s137, %s138
    %p152 = scmp.eq.s32.totalorder %s20, 1
    %p153 = por %p151, %p152
    %p155 = scmp.ne.s32.totalorder %s138, %s154
    %p156 = scmp.eq.s32.totalorder %s20, 0
    %p157 = por %p155, %p156
    %s158 = ssub.s32 %s14, %s21
    %p159 = scmp.eq.s32.totalorder %s158, 0
    %s161 = sadd.s32 %s160, 1
    %s162 = scalar_select %p159, %s160, %s161
    %p165 = pneg %p159
    %p166 = scmp.eq.s32.totalorder %s14, 1
    %p167 = por %p165, %p166
    %p168 = scmp.ne.s32.totalorder %s160, %s163
    %p169 = scmp.eq.s32.totalorder %s14, 0
    %p170 = por %p168, %p169
    %p171 = scmp.ne.s32.totalorder %s160, %s163
    %p172 = scmp.eq.s32.totalorder %s19, 1
    %p173 = por %p171, %p172
    %p174 = scmp.ne.s32.totalorder %s163, %s164
    %p175 = scmp.eq.s32.totalorder %s19, 0
    %p176 = por %p174, %p175
    %p177 = scmp.ne.s32.totalorder %s163, %s164
    %p178 = scmp.eq.s32.totalorder %s20, 1
    %p179 = por %p177, %p178
    %p181 = scmp.ne.s32.totalorder %s164, %s180
    %p182 = scmp.eq.s32.totalorder %s20, 0
    %p183 = por %p181, %p182
    %s184 = ssub.s32 %s14, %s21
    %p185 = scmp.eq.s32.totalorder %s184, 0
    %s187 = sadd.s32 %s186, 1
    %s188 = scalar_select %p185, %s186, %s187
    %p191 = pneg %p185
    %p192 = scmp.eq.s32.totalorder %s14, 1
    %p193 = por %p191, %p192
    %p194 = scmp.ne.s32.totalorder %s186, %s189
    %p195 = scmp.eq.s32.totalorder %s14, 0
    %p196 = por %p194, %p195
    %p197 = scmp.ne.s32.totalorder %s186, %s189
    %p198 = scmp.eq.s32.totalorder %s19, 1
    %p199 = por %p197, %p198
    %p200 = scmp.ne.s32.totalorder %s189, %s190
    %p201 = scmp.eq.s32.totalorder %s19, 0
    %p202 = por %p200, %p201
    %p203 = scmp.ne.s32.totalorder %s189, %s190
    %p204 = scmp.eq.s32.totalorder %s20, 1
    %p205 = por %p203, %p204
    %p207 = scmp.ne.s32.totalorder %s190, %s206
    %p208 = scmp.eq.s32.totalorder %s20, 0
    %p209 = por %p207, %p208
    %p210 = scmp.le.s32.totalorder 1, %s14
    %p211 = scmp.lt.s32.totalorder %s14, 3
    %p212 = pnand %p210, %p211
    %p213 = pneg %p212
    // Predicated region
    $region9: #{tpu_custom_call.1} parent=5 // pred_check
      _
    $region10: #{tpu_custom_call.1} parent=5 // pred_check_branch
      %215 = sbr.rel (%p212) target = $region12
    $region11: #{tpu_custom_call.1} parent=5 // pred_region
      %s216 = ssub.s32 %s14, 1
      // Predicated region
      $region13: #{tpu_custom_call.1} parent=11 // pred_check
        %p217 = pneg %p61
      $region14: #{tpu_custom_call.1} parent=11 // pred_check_branch
        %219 = sbr.rel (%p217) target = $region16
      $region15: #{tpu_custom_call.1} parent=11 // pred_region
        _
      $region16: #{tpu_custom_call.1} parent=11 // pred_fallthru
        _
      // Predicated region
      $region17: #{tpu_custom_call.1} parent=11 // pred_check
        %p220 = pneg %p82
      $region18: #{tpu_custom_call.1} parent=11 // pred_check_branch
        %222 = sbr.rel (%p220) target = $region20
      $region19: #{tpu_custom_call.1} parent=11 // pred_region
        _
      $region20: #{tpu_custom_call.1} parent=11 // pred_fallthru
        _
      // Predicated region
      $region21: #{tpu_custom_call.1} parent=11 // pred_check
        %p223 = pneg %p103
      $region22: #{tpu_custom_call.1} parent=11 // pred_check_branch
        %225 = sbr.rel (%p223) target = $region24
      $region23: #{tpu_custom_call.1} parent=11 // pred_region
        _
      $region24: #{tpu_custom_call.1} parent=11 // pred_fallthru
        _
      // Predicated region
      $region25: #{tpu_custom_call.1} parent=11 // pred_check
        %p226 = pneg %p124
      $region26: #{tpu_custom_call.1} parent=11 // pred_check_branch
        %228 = sbr.rel (%p226) target = $region28
      $region27: #{tpu_custom_call.1} parent=11 // pred_region
        _
      $region28: #{tpu_custom_call.1} parent=11 // pred_fallthru
        _
    $region12: #{tpu_custom_call.1} parent=5 // pred_fallthru
      _
    %p229 = scmp.lt.s32.totalorder %s14, 2
    // Predicated region
    $region29: #{tpu_custom_call.1} parent=5 // pred_check
      %p230 = pneg %p229
    $region30: #{tpu_custom_call.1} parent=5 // pred_check_branch
      %232 = sbr.rel (%p230) target = $region32
    $region31: #{tpu_custom_call.1} parent=5 // pred_region
      // Predicated region
      $region33: #{tpu_custom_call.1} parent=31 // pred_check
        %p233 = pneg %p34
      $region34: #{tpu_custom_call.1} parent=31 // pred_check_branch
        %235 = sbr.rel (%p233) target = $region36
      $region35: #{tpu_custom_call.1} parent=31 // pred_region
        %s236 = smul.u32 4, %s14
        %p237 = scmp.lt.s32.totalorder %s236, 7
        %s238 = scalar_select %p237, %s236, 7
        %s239 = smul.addr %s238, 8
        %s240 = scalar_lea.vmem %s0, %s239
        %s241 = smul.u32 4, %s14
      $region36: #{tpu_custom_call.1} parent=31 // pred_fallthru
        _
    $region32: #{tpu_custom_call.1} parent=5 // pred_fallthru
      _
    %p242 = scmp.le.s32.totalorder 1, %s14
    %p243 = scmp.lt.s32.totalorder %s14, 3
    %p244 = pnand %p242, %p243
    %p245 = pneg %p244
    // Predicated region
    $region37: #{tpu_custom_call.1} parent=5 // pred_check
      _
    $region38: #{tpu_custom_call.1} parent=5 // pred_check_branch
      %247 = sbr.rel (%p244) target = $region40
    $region39: #{tpu_custom_call.1} parent=5 // pred_region
      %s248 = ssub.s32 %s14, 1
      %s249 = smul.u32 4, %s19
      %p250 = scmp.lt.s32.totalorder %s249, 7
      %s251 = scalar_select %p250, %s249, 7
      %s252 = smul.addr %s251, 8
      %s253 = scalar_lea.vmem %s0, %s252
      %p254 = pneg %p40
      %p255 = pneg %p37
      %p256 = pneg %p61
      %p257 = pneg %p58
      %p258 = pneg %p82
      %p259 = pneg %p79
      %p260 = pneg %p103
      %p261 = pneg %p100
      %p262 = pneg %p124
      %p263 = pneg %p121
      %p264 = pneg %p150
      %p265 = pneg %p147
      %s266 = smul.u32 4, %s19
      %p267 = scmp.lt.s32.totalorder %s266, 7
      %s268 = scalar_select %p267, %s266, 7
      %s269 = smul.addr %s268, 8
      %s270 = scalar_lea.vmem %s5, %s269
      %p271 = pneg %p176
      %p272 = pneg %p173
      %s273 = smul.u32 4, %s19
      %p274 = scmp.lt.s32.totalorder %s273, 7
      %s275 = scalar_select %p274, %s273, 7
      %s276 = smul.addr %s275, 8
      %s277 = scalar_lea.vmem %s6, %s276
      %p278 = pneg %p202
      %p279 = pneg %p199
      %s280 = smul.u32 4, %s19
      %p281 = scmp.lt.s32.totalorder %s280, 7
      %s282 = scalar_select %p281, %s280, 7
      %s283 = smul.addr %s282, 8
      %s284 = scalar_lea.vmem %s7, %s283
      %s285 = smul.u32 4, %s19
      %p286 = scmp.lt.s32.totalorder %s285, 7
      %s287 = scalar_select %p286, %s285, 7
      %s288 = smul.addr %s287, 8
      %s289 = scalar_lea.vmem %s0, %s288
      %s290 = smul.u32 4, %s19
      %s291 = smul.u32 4, %s19
      %p292 = scmp.lt.s32.totalorder %s291, 7
      %s293 = scalar_select %p292, %s291, 7
      %s294 = smul.addr %s293, 8
      %s295 = scalar_lea.vmem %s5, %s294
      %s296 = smul.u32 4, %s19
      %s297 = smul.u32 4, %s19
      %p298 = scmp.lt.s32.totalorder %s297, 7
      %s299 = scalar_select %p298, %s297, 7
      %s300 = smul.addr %s299, 8
      %s301 = scalar_lea.vmem %s6, %s300
      %s302 = smul.u32 4, %s19
      %s303 = smul.u32 4, %s19
      %p304 = scmp.lt.s32.totalorder %s303, 7
      %s305 = scalar_select %p304, %s303, 7
      %s306 = smul.addr %s305, 8
      %s307 = scalar_lea.vmem %s7, %s306
      %s308 = smul.u32 4, %s19
      %v310 = vld [vmem:[%s289] sm:$0xff]
      %v311 = vld [vmem:[%s289 + $0x8] sm:$0xff]
      %v312 = vld [vmem:[%s289 + $0x10] sm:$0xff]
      %v313 = vld [vmem:[%s289 + $0x18] sm:$0xff]
      %v314 = vpack.c.bf16 %v311, %v310
      %v315 = vpack.c.bf16 %v313, %v312
      %v316 = vld [vmem:[%s1] sm:$0xf]
      %v317 = vld [vmem:[%s1 + $0x4] sm:$0xf]
      %v318 = vld [vmem:[%s1 + $0x8] sm:$0xf]
      %v319 = vld [vmem:[%s1 + $0xc] sm:$0xf]
      %v320 = vld [vmem:[%s2] sm:$0x1]
      %v322 = vlaneseq
      %v323 = vshrl.u32 %v322, 7
      %v324 = vsub.s32 0, %v323
      %v325 = vrot.slane %v320, %v324
      %v331 = vunpack.c.l.b16 %v316
      %v332 = vunpack.c.l.b16 %v317
      %v333 = vunpack.c.l.b16 %v318
      %v334 = vunpack.c.l.b16 %v319
      %v335 = vpack.c.b16 %v332, %v331
      %v336 = vpack.c.b16 %v334, %v333
      %vm339 = vcmask 261120
      %v341 = vsel %vm339, %v314, 0
      %v344 = vsel %vm339, %v315, 0
      %346 = vmatprep.subr.bf16.mxu0 0
      %347 = vmatpush1.bf16.msra.mxu0 %v335
      %348 = vmatprep.subr.bf16.mxu0 0
      %349 = vmatpush1.bf16.msra.mxu0 %v336
      %350 = vmatprep.subr.bf16.mxu0 0
      %351 = vmatpush1.bf16.msra.mxu0 0
      %352 = vmatprep.subr.bf16.mxu0 0
      %353 = vmatpush1.bf16.msra.mxu0 0
      %354 = vmatprep.subr.bf16.mxu0 0
      %355 = vmatpush1.bf16.msra.mxu0 0
      %356 = vmatprep.subr.bf16.mxu0 0
      %357 = vmatpush1.bf16.msra.mxu0 0
      %358 = vmatprep.subr.bf16.mxu0 0
      %359 = vmatpush1.bf16.msra.mxu0 0
      %360 = vmatprep.subr.bf16.mxu0 0
      %361 = vmatpush1.bf16.msra.mxu0 0
      %362 = vmatprep.subr.bf16.mxu0 0
      %363 = vmatpush1.bf16.msra.mxu0 0
      %364 = vmatprep.subr.bf16.mxu0 0
      %365 = vmatpush1.bf16.msra.mxu0 0
      %366 = vmatprep.subr.bf16.mxu0 0
      %367 = vmatpush1.bf16.msra.mxu0 0
      %368 = vmatprep.subr.bf16.mxu0 0
      %369 = vmatpush1.bf16.msra.mxu0 0
      %370 = vmatprep.subr.bf16.mxu0 0
      %371 = vmatpush1.bf16.msra.mxu0 0
      %372 = vmatprep.subr.bf16.mxu0 0
      %373 = vmatpush1.bf16.msra.mxu0 0
      %374 = vmatprep.subr.bf16.mxu0 0
      %375 = vmatpush1.bf16.msra.mxu0 0
      %376 = vmatprep.subr.bf16.mxu0 0
      %377 = vmatpush1.bf16.msra.mxu0 0
      %378 = vmatprep.mubr.bf16.mxu0 0
      %379 = vmatmul.mubr.bf16.gmra.mrb[0].mxu0 %v341
      %v380 = vpop.f32.mrb[0].mxu0
      %v381 = vadd.f32 %v325, %v380
      %v382 = vpop.f32.mrb[0].mxu0
      %v383 = vpop.f32.mrb[0].mxu0
      %v384 = vadd.f32 %v325, %v383
      %v385 = vpop.f32.mrb[0].mxu0
      %386 = vmatprep.mubr.bf16.mxu0 0
      %387 = vmatmul.mubr.bf16.gmra.mrb[0].mxu0 %v344
      %v388 = vpop.f32.mrb[0].mxu0
      %v389 = vadd.f32 %v325, %v388
      %v390 = vpop.f32.mrb[0].mxu0
      %v391 = vpop.f32.mrb[0].mxu0
      %v392 = vadd.f32 %v325, %v391
      %v393 = vpop.f32.mrb[0].mxu0
      %394 = vdwg.mxu0
      %v395 = vmul.f32 %v381, %v381
      %v396 = vmul.f32 %v384, %v384
      %v397 = vmul.f32 %v389, %v389
      %v398 = vmul.f32 %v392, %v392
      %v399 = vmul.f32 %v381, %v395
      %v400 = vmul.f32 %v384, %v396
      %v401 = vmul.f32 %v389, %v397
      %v402 = vmul.f32 %v392, %v398
      %v403 = vmul.f32 %v399, 0.044715
      %v404 = vmul.f32 %v400, 0.044715
      %v405 = vmul.f32 %v401, 0.044715
      %v406 = vmul.f32 %v402, 0.044715
      %v407 = vadd.f32 %v381, %v403
      %v408 = vadd.f32 %v384, %v404
      %v409 = vadd.f32 %v389, %v405
      %v410 = vadd.f32 %v392, %v406
      %v411 = vmul.f32 %v407, 0.7978846
      %v412 = vmul.f32 %v408, 0.7978846
      %v413 = vmul.f32 %v409, 0.7978846
      %v414 = vmul.f32 %v410, 0.7978846
      %v415 = vtanh.pop %v411
      %v416 = vtanh.pop %v412
      %v417 = vtanh.pop %v413
      %v418 = vtanh.pop %v414
      %v419 = vadd.f32 %v415, 1.0
      %v420 = vadd.f32 %v416, 1.0
      %v421 = vadd.f32 %v417, 1.0
      %v422 = vadd.f32 %v418, 1.0
      %v423 = vmul.f32 %v419, 0.5
      %v424 = vmul.f32 %v420, 0.5
      %v425 = vmul.f32 %v421, 0.5
      %v426 = vmul.f32 %v422, 0.5
      %v427 = vmul.f32 %v381, %v423
      %v428 = vmul.f32 %v384, %v424
      %v429 = vmul.f32 %v389, %v425
      %v430 = vmul.f32 %v392, %v426
      %v431 = vpack.c.bf16 %v428, %v427
      %v432 = vpack.c.bf16 %v430, %v429
      %v433 = vld [vmem:[%s3] sm:$0xf]
      %v434 = vld [vmem:[%s3 + $0x4] sm:$0xf]
      %v435 = vld [vmem:[%s3 + $0x8] sm:$0xf]
      %v436 = vld [vmem:[%s3 + $0xc] sm:$0xf]
      %v437 = vld [vmem:[%s4] sm:$0x1]
      %v439 = vlaneseq
      %v440 = vshrl.u32 %v439, 7
      %v441 = vsub.s32 0, %v440
      %v442 = vrot.slane %v437, %v441
      %v448 = vunpack.c.l.b16 %v433
      %v449 = vunpack.c.l.b16 %v434
      %v450 = vunpack.c.l.b16 %v435
      %v451 = vunpack.c.l.b16 %v436
      %v452 = vpack.c.b16 %v449, %v448
      %v453 = vpack.c.b16 %v451, %v450
      %v457 = vsel %vm339, %v431, 0
      %v460 = vsel %vm339, %v432, 0
      %462 = vmatprep.subr.bf16.mxu0 0
      %463 = vmatpush1.bf16.msra.mxu0 %v452
      %464 = vmatprep.subr.bf16.mxu0 0
      %465 = vmatpush1.bf16.msra.mxu0 %v453
      %466 = vmatprep.subr.bf16.mxu0 0
      %467 = vmatpush1.bf16.msra.mxu0 0
      %468 = vmatprep.subr.bf16.mxu0 0
      %469 = vmatpush1.bf16.msra.mxu0 0
      %470 = vmatprep.subr.bf16.mxu0 0
      %471 = vmatpush1.bf16.msra.mxu0 0
      %472 = vmatprep.subr.bf16.mxu0 0
      %473 = vmatpush1.bf16.msra.mxu0 0
      %474 = vmatprep.subr.bf16.mxu0 0
      %475 = vmatpush1.bf16.msra.mxu0 0
      %476 = vmatprep.subr.bf16.mxu0 0
      %477 = vmatpush1.bf16.msra.mxu0 0
      %478 = vmatprep.subr.bf16.mxu0 0
      %479 = vmatpush1.bf16.msra.mxu0 0
      %480 = vmatprep.subr.bf16.mxu0 0
      %481 = vmatpush1.bf16.msra.mxu0 0
      %482 = vmatprep.subr.bf16.mxu0 0
      %483 = vmatpush1.bf16.msra.mxu0 0
      %484 = vmatprep.subr.bf16.mxu0 0
      %485 = vmatpush1.bf16.msra.mxu0 0
      %486 = vmatprep.subr.bf16.mxu0 0
      %487 = vmatpush1.bf16.msra.mxu0 0
      %488 = vmatprep.subr.bf16.mxu0 0
      %489 = vmatpush1.bf16.msra.mxu0 0
      %490 = vmatprep.subr.bf16.mxu0 0
      %491 = vmatpush1.bf16.msra.mxu0 0
      %492 = vmatprep.subr.bf16.mxu0 0
      %493 = vmatpush1.bf16.msra.mxu0 0
      %494 = vmatprep.mubr.bf16.mxu0 0
      %495 = vmatmul.mubr.bf16.gmra.mrb[0].mxu0 %v457
      %v496 = vpop.f32.mrb[0].mxu0
      %v497 = vadd.f32 %v442, %v496
      %v498 = vpop.f32.mrb[0].mxu0
      %v499 = vpop.f32.mrb[0].mxu0
      %v500 = vadd.f32 %v442, %v499
      %v501 = vpop.f32.mrb[0].mxu0
      %502 = vmatprep.mubr.bf16.mxu0 0
      %503 = vmatmul.mubr.bf16.gmra.mrb[0].mxu0 %v460
      %v504 = vpop.f32.mrb[0].mxu0
      %v505 = vadd.f32 %v442, %v504
      %v506 = vpop.f32.mrb[0].mxu0
      %v507 = vpop.f32.mrb[0].mxu0
      %v508 = vadd.f32 %v442, %v507
      %v509 = vpop.f32.mrb[0].mxu0
      %510 = vdwg.mxu0
      %v511 = vmul.f32 %v497, %v497
      %v512 = vmul.f32 %v500, %v500
      %v513 = vmul.f32 %v505, %v505
      %v514 = vmul.f32 %v508, %v508
      %vm515 = vcmask 31744
      %v516 = vsel %vm515, %v511, 0.0
      %517 = vadd.xlane.f32.xlu0 %v516
      %v518 = vpop.xlane.xlu0 %517
      %v519 = vsel %vm515, %v512, 0.0
      %520 = vadd.xlane.f32.xlu0 %v519
      %v521 = vpop.xlane.xlu0 %520
      %v522 = vsel %vm515, %v513, 0.0
      %523 = vadd.xlane.f32.xlu0 %v522
      %v524 = vpop.xlane.xlu0 %523
      %v525 = vsel %vm515, %v514, 0.0
      %526 = vadd.xlane.f32.xlu0 %v525
      %v527 = vpop.xlane.xlu0 %526
      %v528 = vadd.f32 %v518, 0.0
      %v529 = vadd.f32 %v521, 0.0
      %v530 = vadd.f32 %v524, 0.0
      %v531 = vadd.f32 %v527, 0.0
      %536 = vrot.lane.b32.xlu0 %v511, 124
      %v537 = vpop.permute.xlu0 %536
      %538 = vrot.lane.b32.xlu0 %v512, 124
      %v539 = vpop.permute.xlu0 %538
      %540 = vrot.lane.b32.xlu0 %v513, 124
      %v541 = vpop.permute.xlu0 %540
      %542 = vrot.lane.b32.xlu0 %v514, 124
      %v543 = vpop.permute.xlu0 %542
      %v548 = vsel %vm515, %v537, 0.0
      %549 = vadd.xlane.f32.xlu0 %v548
      %v550 = vpop.xlane.xlu0 %549
      %v551 = vsel %vm515, %v539, 0.0
      %552 = vadd.xlane.f32.xlu0 %v551
      %v553 = vpop.xlane.xlu0 %552
      %v554 = vsel %vm515, %v541, 0.0
      %555 = vadd.xlane.f32.xlu0 %v554
      %v556 = vpop.xlane.xlu0 %555
      %v557 = vsel %vm515, %v543, 0.0
      %558 = vadd.xlane.f32.xlu0 %v557
      %v559 = vpop.xlane.xlu0 %558
      %v560 = vadd.f32 %v528, %v550
      %v561 = vadd.f32 %v529, %v553
      %v562 = vadd.f32 %v530, %v556
      %v563 = vadd.f32 %v531, %v559
      %564 = vrot.lane.b32.xlu0 %v511, 120
      %v565 = vpop.permute.xlu0 %564
      %566 = vrot.lane.b32.xlu0 %v512, 120
      %v567 = vpop.permute.xlu0 %566
      %568 = vrot.lane.b32.xlu0 %v513, 120
      %v569 = vpop.permute.xlu0 %568
      %570 = vrot.lane.b32.xlu0 %v514, 120
      %v571 = vpop.permute.xlu0 %570
      %vm576 = vcmask 64512
      %v577 = vsel %vm576, %v565, 0.0
      %578 = vadd.xlane.f32.xlu0 %v577
      %v579 = vpop.xlane.xlu0 %578
      %v580 = vsel %vm576, %v567, 0.0
      %581 = vadd.xlane.f32.xlu0 %v580
      %v582 = vpop.xlane.xlu0 %581
      %v583 = vsel %vm576, %v569, 0.0
      %584 = vadd.xlane.f32.xlu0 %v583
      %v585 = vpop.xlane.xlu0 %584
      %v586 = vsel %vm576, %v571, 0.0
      %587 = vadd.xlane.f32.xlu0 %v586
      %v588 = vpop.xlane.xlu0 %587
      %v589 = vadd.f32 %v560, %v579
      %v590 = vadd.f32 %v561, %v582
      %v591 = vadd.f32 %v562, %v585
      %v592 = vadd.f32 %v563, %v588
      %v593 = vmax.f32 %v528, 1e-12
      %v594 = vmax.f32 %v529, 1e-12
      %v595 = vmax.f32 %v530, 1e-12
      %v596 = vmax.f32 %v531, 1e-12
      %v597 = vrsqrt.pop %v593
      %v598 = vrsqrt.pop %v594
      %v599 = vrsqrt.pop %v595
      %v600 = vrsqrt.pop %v596
      %v601 = vmul.f32 %v497, %v597
      %v602 = vmul.f32 %v500, %v598
      %v603 = vmul.f32 %v505, %v599
      %v604 = vmul.f32 %v508, %v600
      %605 = vst.msk [vmem:[%s295] sm:$0xff] %vm515, %v601
      %606 = vst.msk [vmem:[%s295 + $0x8] sm:$0xff] %vm515, %v602
      %607 = vst.msk [vmem:[%s295 + $0x10] sm:$0xff] %vm515, %v603
      %608 = vst.msk [vmem:[%s295 + $0x18] sm:$0xff] %vm515, %v604
      %v609 = vmax.f32 %v560, 1e-12
      %v610 = vmax.f32 %v561, 1e-12
      %v611 = vmax.f32 %v562, 1e-12
      %v612 = vmax.f32 %v563, 1e-12
      %v613 = vrsqrt.pop %v609
      %v614 = vrsqrt.pop %v610
      %v615 = vrsqrt.pop %v611
      %v616 = vrsqrt.pop %v612
      %v617 = vmul.f32 %v497, %v613
      %v618 = vmul.f32 %v500, %v614
      %v619 = vmul.f32 %v505, %v615
      %v620 = vmul.f32 %v508, %v616
      %621 = vst.msk [vmem:[%s301] sm:$0xff] %vm576, %v617
      %622 = vst.msk [vmem:[%s301 + $0x8] sm:$0xff] %vm576, %v618
      %623 = vst.msk [vmem:[%s301 + $0x10] sm:$0xff] %vm576, %v619
      %624 = vst.msk [vmem:[%s301 + $0x18] sm:$0xff] %vm576, %v620
      %v625 = vmax.f32 %v589, 1e-12
      %v626 = vmax.f32 %v590, 1e-12
      %v627 = vmax.f32 %v591, 1e-12
      %v628 = vmax.f32 %v592, 1e-12
      %v629 = vrsqrt.pop %v625
      %v630 = vrsqrt.pop %v626
      %v631 = vrsqrt.pop %v627
      %v632 = vrsqrt.pop %v628
      %v633 = vmul.f32 %v497, %v629
      %v634 = vmul.f32 %v500, %v630
      %v635 = vmul.f32 %v505, %v631
      %v636 = vmul.f32 %v508, %v632
      %vm637 = vcmask 130048
      %638 = vst.msk [vmem:[%s307] sm:$0xff] %vm637, %v633
      %639 = vst.msk [vmem:[%s307 + $0x8] sm:$0xff] %vm637, %v634
      %640 = vst.msk [vmem:[%s307 + $0x10] sm:$0xff] %vm637, %v635
      %641 = vst.msk [vmem:[%s307 + $0x18] sm:$0xff] %vm637, %v636
      %s642 = smul.u32 4, %s19
      %p643 = scmp.lt.s32.totalorder %s642, 7
      %s644 = scalar_select %p643, %s642, 7
      %s645 = smul.addr %s644, 8
      %s646 = scalar_lea.vmem %s5, %s645
      %s647 = smul.u32 4, %s19
      %p648 = scmp.lt.s32.totalorder %s647, 7
      %s649 = scalar_select %p648, %s647, 7
      %s650 = smul.addr %s649, 8
      %s651 = scalar_lea.vmem %s6, %s650
      %s652 = smul.u32 4, %s19
      %p653 = scmp.lt.s32.totalorder %s652, 7
      %s654 = scalar_select %p653, %s652, 7
      %s655 = smul.addr %s654, 8
      %s656 = scalar_lea.vmem %s7, %s655
      // Predicated region
      $region41: #{tpu_custom_call.1} parent=39 // pred_check
        %p657 = pneg %p147
      $region42: #{tpu_custom_call.1} parent=39 // pred_check_branch
        %659 = sbr.rel (%p657) target = $region44
      $region43: #{tpu_custom_call.1} parent=39 // pred_region
        %s660 = smul.u32 4, %s19
      $region44: #{tpu_custom_call.1} parent=39 // pred_fallthru
        _
      // Predicated region
      $region45: #{tpu_custom_call.1} parent=39 // pred_check
        %p661 = pneg %p173
      $region46: #{tpu_custom_call.1} parent=39 // pred_check_branch
        %663 = sbr.rel (%p661) target = $region48
      $region47: #{tpu_custom_call.1} parent=39 // pred_region
        %s664 = smul.u32 4, %s19
      $region48: #{tpu_custom_call.1} parent=39 // pred_fallthru
        _
      // Predicated region
      $region49: #{tpu_custom_call.1} parent=39 // pred_check
        %p665 = pneg %p199
      $region50: #{tpu_custom_call.1} parent=39 // pred_check_branch
        %667 = sbr.rel (%p665) target = $region52
      $region51: #{tpu_custom_call.1} parent=39 // pred_region
        %s668 = smul.u32 4, %s19
      $region52: #{tpu_custom_call.1} parent=39 // pred_fallthru
        _
    $region40: #{tpu_custom_call.1} parent=5 // pred_fallthru
      _
    %p669 = scmp.le.s32.totalorder 2, %s14
    // Predicated region
    $region53: #{tpu_custom_call.1} parent=5 // pred_check
      %p670 = pneg %p669
    $region54: #{tpu_custom_call.1} parent=5 // pred_check_branch
      %672 = sbr.rel (%p670) target = $region56
    $region55: #{tpu_custom_call.1} parent=5 // pred_region
      %s673 = ssub.s32 %s14, 2
      // Predicated region
      $region57: #{tpu_custom_call.1} parent=55 // pred_check
        %p674 = pneg %p153
      $region58: #{tpu_custom_call.1} parent=55 // pred_check_branch
        %676 = sbr.rel (%p674) target = $region60
      $region59: #{tpu_custom_call.1} parent=55 // pred_region
        %s677 = smul.u32 4, %s20
        %p678 = scmp.lt.s32.totalorder %s677, 7
        %s679 = scalar_select %p678, %s677, 7
        %s680 = smul.addr %s679, 8
        %s681 = scalar_lea.vmem %s5, %s680
      $region60: #{tpu_custom_call.1} parent=55 // pred_fallthru
        _
      // Predicated region
      $region61: #{tpu_custom_call.1} parent=55 // pred_check
        %p682 = pneg %p179
      $region62: #{tpu_custom_call.1} parent=55 // pred_check_branch
        %684 = sbr.rel (%p682) target = $region64
      $region63: #{tpu_custom_call.1} parent=55 // pred_region
        %s685 = smul.u32 4, %s20
        %p686 = scmp.lt.s32.totalorder %s685, 7
        %s687 = scalar_select %p686, %s685, 7
        %s688 = smul.addr %s687, 8
        %s689 = scalar_lea.vmem %s6, %s688
      $region64: #{tpu_custom_call.1} parent=55 // pred_fallthru
        _
      // Predicated region
      $region65: #{tpu_custom_call.1} parent=55 // pred_check
        %p690 = pneg %p205
      $region66: #{tpu_custom_call.1} parent=55 // pred_check_branch
        %692 = sbr.rel (%p690) target = $region68
      $region67: #{tpu_custom_call.1} parent=55 // pred_region
        %s693 = smul.u32 4, %s20
        %p694 = scmp.lt.s32.totalorder %s693, 7
        %s695 = scalar_select %p694, %s693, 7
        %s696 = smul.addr %s695, 8
        %s697 = scalar_lea.vmem %s7, %s696
      $region68: #{tpu_custom_call.1} parent=55 // pred_fallthru
        _
    $region56: #{tpu_custom_call.1} parent=5 // pred_fallthru
      _
  $region6: #{tpu_custom_call.1} parent=0 // loop_footer
    %s18 = sadd.s32 1, %s14
  $region7: #{tpu_custom_call.1} parent=0 // loop_footer_branch
    %13 = sbr.rel target = $region3
  $region8: #{tpu_custom_call.1} parent=0 // loop_exit
    _

</llo_original>
